<compile_context>
chip_gen: v5e
topology: v5e:2x2
jax: 0.10.0
libtpu: 0.0.40
codegen_flags: <defaults>
</compile_context>

<pallas_src>
import jax
import jax.numpy as jnp
from jax.experimental import pallas as pl
from jax.experimental.pallas import tpu as pltpu


def _round_up(x, m):
    return ((x + m - 1) // m) * m


def _fit(a, shape, dtype, fill=0.0):
    """Pad/cast `a` to (shape, dtype). No-op (no extra HBM pass) if already there."""
    shape = tuple(shape)
    if a.shape == shape and a.dtype == jnp.dtype(dtype):
        return a
    out = jnp.full(shape, fill, dtype=dtype)
    return out.at[tuple(slice(0, s) for s in a.shape)].set(a.astype(dtype))


# ---------------------------------------------------------------------------
# Kernel bodies
# ---------------------------------------------------------------------------
def _logreg_kernel(x_ref, w_ref, b_ref, o_ref):
    """Whole feature dim resident: logits = X @ W + b, row-wise softmax."""
    logits = jnp.dot(x_ref[...], w_ref[...],
                     preferred_element_type=jnp.float32) + b_ref[...]
    # Numerically-stable softmax along the class axis. Padded class columns
    # carry a -1e30 bias -> exp() underflows to 0.
    m = jnp.max(logits, axis=1, keepdims=True)
    e = jnp.exp(logits - m)
    denom = jnp.sum(e, axis=1, keepdims=True)
    o_ref[...] = (e * pl.reciprocal(denom, approx=True)).astype(o_ref.dtype)


def _logreg_kernel_ksplit(x_ref, w_ref, b_ref, o_ref, acc_ref):
    """Feature (D) axis split over the last grid dim; f32 accumulator scratch."""
    k = pl.program_id(1)

    @pl.when(k == 0)
    def _():
        acc_ref[...] = jnp.zeros_like(acc_ref)

    acc_ref[...] += jnp.dot(x_ref[...], w_ref[...],
                            preferred_element_type=jnp.float32)

    @pl.when(k == pl.num_programs(1) - 1)
    def _():
        logits = acc_ref[...] + b_ref[...]
        m = jnp.max(logits, axis=1, keepdims=True)
        e = jnp.exp(logits - m)
        denom = jnp.sum(e, axis=1, keepdims=True)
        o_ref[...] = (e * pl.reciprocal(denom, approx=True)).astype(o_ref.dtype)


# ---------------------------------------------------------------------------
# Wrapper
# ---------------------------------------------------------------------------
def pt_logreg_forward(x, w, b, *, tile_n=None, use_bf16=True,
                      out_dtype=jnp.float32):
    """softmax(x @ w + b, axis=1) via a Pallas TPU kernel.

    x: (N, D), w: (D, C), b: (1, C)  ->  (N, C) `out_dtype`
    """
    N, D = x.shape
    Dw, C = w.shape
    assert D == Dw and b.shape == (1, C)

    compute_dtype = jnp.bfloat16 if use_bf16 else jnp.float32
    in_bytes = 2 if use_bf16 else 4
    sub_mult = 16 if use_bf16 else 8        # sublane tile for the compute dtype
    out_bytes = jnp.dtype(out_dtype).itemsize

    # Lane-dense 128-padded feature / class dims (full MXU, unmasked stores).
    D_pad = _round_up(max(D, 1), 128)
    C_pad = _round_up(max(C, 1), 128)

    # ---- per-generation VMEM budget / megacore query -----------------------
    try:
        info = pltpu.get_tpu_info()
        vmem_cap = int(getattr(info, "vmem_capacity_bytes", 64 << 20))
        n_cores = int(getattr(info, "num_cores", 0) or 0)
    except Exception:                       # conservative fallback
        vmem_cap, n_cores = 64 << 20, 0
    # v7x: 64 MiB VMEM / TC, 2 TCs. v5e/v6e: 128 MiB, single TC.
    multicore = (n_cores >= 2) or (n_cores == 0 and vmem_cap < (100 << 20))
    vmem_limit_cap = int(min(vmem_cap - (16 << 20), 96 << 20))
    budget = vmem_limit_cap - (4 << 20)

    # ---- does a single-buffered W fit resident in VMEM? --------------------
    w_resident_bytes = D_pad * C_pad * in_bytes         # single-buffered
    b_bytes = C_pad * 4                                  # single-buffered, f32
    per_row = 2 * D_pad * in_bytes + 2 * C_pad * out_bytes   # dbl-buf X + out
    w_fits = (w_resident_bytes + b_bytes + sub_mult * per_row) <= budget

    if w_fits:
        # ---------------- batch-tiled grid, W fully resident -----------------
        if tile_n is None:
            tile_n = (budget - w_resident_bytes - b_bytes) // per_row
            tile_n = max(sub_mult, min(2048, tile_n))
            tile_n = (tile_n // sub_mult) * sub_mult
            # don't pad the batch beyond N
            tile_n = min(tile_n, max(sub_mult, _round_up(N, sub_mult)))
            if multicore and N > tile_n:
                # leave >=2 grid steps so the "parallel" axis shards over 2 TCs
                tile_n = min(tile_n,
                             max(sub_mult, _round_up(pl.cdiv(N, 2), sub_mult)))
        assert tile_n % sub_mult == 0 and tile_n >= sub_mult

        grid_n = pl.cdiv(N, tile_n)
        if multicore and grid_n > 1 and grid_n % 2 == 1:
            # even grid count -> even split across the two TensorCores
            grid_n += 1
            tile_n = max(sub_mult, _round_up(pl.cdiv(N, grid_n), sub_mult))
        N_pad = grid_n * tile_n

        x_p = _fit(x, (N_pad, D_pad), compute_dtype)
        w_p = _fit(w, (D_pad, C_pad), compute_dtype)
        b_p = _fit(b, (1, C_pad), jnp.float32, fill=-1e30)

        vmem_need = (2 * tile_n * D_pad * in_bytes      # dbl-buffered X tile
                     + 2 * tile_n * C_pad * out_bytes   # dbl-buffered out tile
                     + w_resident_bytes + b_bytes)      # single-buffered W, b
        vmem_limit = int(min(vmem_limit_cap, vmem_need + (4 << 20)))

        cost = pl.CostEstimate(
            flops=2 * N_pad * D_pad * C_pad,
            transcendentals=N_pad * C_pad + N_pad,
            bytes_accessed=in_bytes * (N_pad * D_pad + D_pad * C_pad)
                           + 4 * C_pad + out_bytes * N_pad * C_pad,
        )

        out_padded = pl.pallas_call(
            _logreg_kernel,
            out_shape=jax.ShapeDtypeStruct((N_pad, C_pad), out_dtype),
            grid_spec=pltpu.PrefetchScalarGridSpec(
                num_scalar_prefetch=0,
                grid=(grid_n,),
                in_specs=[
                    pl.BlockSpec((tile_n, D_pad), lambda i: (i, 0)),
                    # W / b never change across the grid -> single-buffered
                    pl.BlockSpec((D_pad, C_pad), lambda i: (0, 0),
                                 pipeline_mode=pl.Buffered(1)),
                    pl.BlockSpec((1, C_pad), lambda i: (0, 0),
                                 pipeline_mode=pl.Buffered(1)),
                ],
                out_specs=pl.BlockSpec((tile_n, C_pad), lambda i: (i, 0)),
            ),
            compiler_params=pltpu.CompilerParams(
                dimension_semantics=("parallel",),
                vmem_limit_bytes=vmem_limit),
            cost_estimate=cost,
        )(x_p, w_p, b_p)

    else:
        # --------- fallback: W too big to hold resident -> split D ----------
        # TODO(synk): class-tiled online softmax for the case where even a
        # (tile_n, C_pad) f32 accumulator + one 128-row W strip exceeds VMEM.
        if tile_n is None:
            row_c = 3 * C_pad * 4 + 2 * 128 * in_bytes          # acc+2*out + X strip
            hdr = b_bytes + 2 * 128 * C_pad * in_bytes          # b + W strip (dbl)
            tile_n = (budget - hdr) // max(row_c, 1)
            tile_n = max(sub_mult, min(512, (tile_n // sub_mult) * sub_mult))
            tile_n = min(tile_n, max(sub_mult, _round_up(N, sub_mult)))
            if multicore and N > tile_n:
                tile_n = min(tile_n,
                             max(sub_mult, _round_up(pl.cdiv(N, 2), sub_mult)))
        assert tile_n % sub_mult == 0 and tile_n >= sub_mult

        # pick the feature tile to fill what's left of the budget
        fixed = 3 * tile_n * C_pad * 4 + b_bytes        # acc + dbl out + b
        per_d = 2 * C_pad * in_bytes + 2 * tile_n * in_bytes
        tile_d = (budget - fixed) // per_d
        tile_d = int(max(128, min(D_pad, (tile_d // 128) * 128)))

        grid_n = pl.cdiv(N, tile_n)
        if multicore and grid_n > 1 and grid_n % 2 == 1:
            grid_n += 1
            tile_n = max(sub_mult, _round_up(pl.cdiv(N, grid_n), sub_mult))
        grid_d = pl.cdiv(D_pad, tile_d)
        N_pad = grid_n * tile_n
        D_pad = grid_d * tile_d                         # zero-padded features add 0

        x_p = _fit(x, (N_pad, D_pad), compute_dtype)
        w_p = _fit(w, (D_pad, C_pad), compute_dtype)
        b_p = _fit(b, (1, C_pad), jnp.float32, fill=-1e30)

        vmem_need = (2 * tile_n * tile_d * in_bytes     # dbl-buffered X tile
                     + 2 * tile_d * C_pad * in_bytes    # dbl-buffered W tile
                     + 2 * tile_n * C_pad * out_bytes   # dbl-buffered out tile
                     + tile_n * C_pad * 4               # f32 accumulator
                     + b_bytes)
        vmem_limit = int(min(vmem_limit_cap, vmem_need + (4 << 20)))

        cost = pl.CostEstimate(
            flops=2 * N_pad * D_pad * C_pad,
            transcendentals=N_pad * C_pad + N_pad,
            bytes_accessed=in_bytes * (N_pad * D_pad + grid_n * D_pad * C_pad)
                           + 4 * C_pad + out_bytes * N_pad * C_pad,
        )

        out_padded = pl.pallas_call(
            _logreg_kernel_ksplit,
            out_shape=jax.ShapeDtypeStruct((N_pad, C_pad), out_dtype),
            grid_spec=pltpu.PrefetchScalarGridSpec(
                num_scalar_prefetch=0,
                grid=(grid_n, grid_d),
                in_specs=[
                    pl.BlockSpec((tile_n, tile_d), lambda i, k: (i, k)),
                    pl.BlockSpec((tile_d, C_pad), lambda i, k: (k, 0)),
                    pl.BlockSpec((1, C_pad), lambda i, k: (0, 0),
                                 pipeline_mode=pl.Buffered(1)),
                ],
                out_specs=pl.BlockSpec((tile_n, C_pad), lambda i, k: (i, 0)),
                scratch_shapes=[pltpu.VMEM((tile_n, C_pad), jnp.float32)],
            ),
            compiler_params=pltpu.CompilerParams(
                dimension_semantics=("parallel", "arbitrary"),
                vmem_limit_bytes=vmem_limit),
            cost_estimate=cost,
        )(x_p, w_p, b_p)

    # strip batch / class padding only if any was added
    if N_pad != N or C_pad != C:
        out_padded = out_padded[:N, :C]
    return out_padded


if __name__ == "__main__":
    # Small shapes consistent with the module: N datapoints of dim D, C classes.
    N, D, C = 8, 32, 16

    key = jax.random.PRNGKey(0)
    kx, kw = jax.random.split(key)

    # Deterministic parameter init mirroring __init__:
    #   W ~ Normal(0, 1) of shape (D, C), b = zeros((1, C))
    W = jax.random.normal(kw, (D, C), dtype=jnp.float32)
    b = jnp.zeros((1, C), dtype=jnp.float32)

    # Example input batch X of shape (N, D)
    X = jax.random.normal(kx, (N, D), dtype=jnp.float32)

    y = pt_logreg_forward(X, W, b)
    y = jax.block_until_ready(y)
    assert y.shape == (N, C)

    # sanity 1: tight check against a reference using the same bf16-cast inputs
    Xb = X.astype(jnp.bfloat16).astype(jnp.float32)
    Wb = W.astype(jnp.bfloat16).astype(jnp.float32)
    ref_bf16 = jax.nn.softmax(Xb @ Wb + b, axis=1)
    assert jnp.allclose(y, ref_bf16, atol=3e-3, rtol=3e-3)

    # sanity 2: loose check against the full-f32 PyTorch-equivalent reference
    ref_f32 = jax.nn.softmax(X @ W + b, axis=1)
    assert jnp.allclose(y, ref_f32, atol=5e-2, rtol=5e-2)

    # sanity 3: rows are (approximately) probability distributions
    assert jnp.allclose(jnp.sum(y, axis=1), jnp.ones((N,)), atol=5e-3)

    print("KERNEL_OK")
</pallas_src>

<mosaic_0001>
module attributes {stable_mosaic.version = 11 : i64} {
  func.func @_logreg_kernel(%arg0: i32, %arg1: memref<16x128xbf16, #tpu.memory_space<vmem>>, %arg2: memref<128x128xbf16, #tpu.memory_space<vmem>>, %arg3: memref<1x128xf32, #tpu.memory_space<vmem>>, %arg4: memref<16x128xf32, #tpu.memory_space<vmem>>) attributes {dimension_semantics = [#tpu.dimension_semantics<parallel>], iteration_bounds = array<i64: 1>, scalar_prefetch = 0 : i64, scratch_operands = 0 : i64, tpu.core_type = #tpu.core_type<tc>, window_params = [{transform_indices = @transform_0, window_bounds = array<i64: 16, 128>}, {pipeline_mode = #tpu.pipeline_mode<synchronous>, transform_indices = @transform_1, window_bounds = array<i64: 128, 128>}, {pipeline_mode = #tpu.pipeline_mode<synchronous>, transform_indices = @transform_2, window_bounds = array<i64: 1, 128>}, {transform_indices = @transform_3, window_bounds = array<i64: 16, 128>}]} {
    %c0 = arith.constant 0 : index
    %c0_0 = arith.constant 0 : index
    %0 = vector.load %arg1[%c0, %c0_0] : memref<16x128xbf16, #tpu.memory_space<vmem>>, vector<16x128xbf16>
    %c0_1 = arith.constant 0 : index
    %c0_2 = arith.constant 0 : index
    %1 = vector.load %arg2[%c0_1, %c0_2] : memref<128x128xbf16, #tpu.memory_space<vmem>>, vector<128x128xbf16>
    %cst = arith.constant dense<0.000000e+00> : vector<16x128xf32>
    %2 = tpu.matmul %0, %1, %cst {dimension_numbers = #tpu.dot_dimension_numbers<[1], [0], [0], [1], [0, 0, 1, 1], [], []>} : vector<16x128xbf16>, vector<128x128xbf16>, vector<16x128xf32> -> vector<16x128xf32>
    %c0_3 = arith.constant 0 : index
    %c0_4 = arith.constant 0 : index
    %3 = vector.load %arg3[%c0_3, %c0_4] : memref<1x128xf32, #tpu.memory_space<vmem>>, vector<1x128xf32>
    %4 = vector.broadcast %3 : vector<1x128xf32> to vector<16x128xf32>
    %5 = arith.addf %2, %4 : vector<16x128xf32>
    %cst_5 = arith.constant dense<0xFF800000> : vector<16xf32>
    %6 = vector.multi_reduction <maximumf>, %5, %cst_5 [1] : vector<16x128xf32> to vector<16xf32>
    %7 = vector.shape_cast %6 : vector<16xf32> to vector<16x1xf32>
    %8 = vector.broadcast %7 : vector<16x1xf32> to vector<16x128xf32>
    %9 = arith.subf %5, %8 : vector<16x128xf32>
    %10 = math.exp %9 : vector<16x128xf32>
    %cst_6 = arith.constant dense<0.000000e+00> : vector<16xf32>
    %11 = vector.multi_reduction <add>, %10, %cst_6 [1] : vector<16x128xf32> to vector<16xf32>
    %12 = vector.shape_cast %11 : vector<16xf32> to vector<16x1xf32>
    %13 = tpu.reciprocal %12 {approx = true} : vector<16x1xf32> -> vector<16x1xf32>
    %14 = vector.broadcast %13 : vector<16x1xf32> to vector<16x128xf32>
    %15 = arith.mulf %10, %14 : vector<16x128xf32>
    %c0_7 = arith.constant 0 : index
    %c0_8 = arith.constant 0 : index
    %16 = vector.load %arg4[%c0_7, %c0_8] : memref<16x128xf32, #tpu.memory_space<vmem>>, vector<16x128xf32>
    tpu.vector_store %arg4[%c0_7, %c0_8], %15 {strides = array<i32>} : memref<16x128xf32, #tpu.memory_space<vmem>>, vector<16x128xf32>,
    return
  }
  func.func @transform_0(%arg0: i32) -> (i32, i32) {
    %c0_i32 = arith.constant 0 : i32
    %c0_i32_0 = arith.constant 0 : i32
    return %arg0, %c0_i32 : i32, i32
  }
  func.func @transform_1(%arg0: i32) -> (i32, i32) {
    %c0_i32 = arith.constant 0 : i32
    %c0_i32_0 = arith.constant 0 : i32
    %c0_i32_1 = arith.constant 0 : i32
    return %c0_i32, %c0_i32_0 : i32, i32
  }
  func.func @transform_2(%arg0: i32) -> (i32, i32) {
    %c0_i32 = arith.constant 0 : i32
    %c0_i32_0 = arith.constant 0 : i32
    %c0_i32_1 = arith.constant 0 : i32
    return %c0_i32, %c0_i32_0 : i32, i32
  }
  func.func @transform_3(%arg0: i32) -> (i32, i32) {
    %c0_i32 = arith.constant 0 : i32
    %c0_i32_0 = arith.constant 0 : i32
    return %arg0, %c0_i32 : i32, i32
  }
}

</mosaic_0001>

<llo_original>
// kernel: tpu_custom_call.1
$region0: #{tpu_custom_call.1}
  #allocation0 [shape = 'u32[]', space=smem, size = 0x4, offset = 0x4, fixed_abs, tag = 'smem constant byte address 0x4 - core index']
  #allocation1 [shape = 'u32[72,128]{1,0:T(1,128)}', space=vmem, size = 0x9000, scoped, tag = 'internal scratch']
  %s0 = inlined_call_operand.hbm [shape: bf16[16,128], index: 0, kind: input, shape index: {}]
  %s1 = inlined_call_operand.hbm [shape: bf16[128,128], index: 1, kind: input, shape index: {}]
  %s2 = inlined_call_operand.vmem [shape: f32[1,128], index: 2, kind: input, shape index: {}]
  %s3 = inlined_call_operand.hbm [shape: f32[16,128], index: 3, kind: output, shape index: {}]
  %s4 = sld [smem:[#allocation0]]
  $region30: #{tpu_custom_call.1} parent=0
    _
  %s6 = ssub.s32 1, %s4
  %s7 = scalar_select 0, %s6, %s4
  $region1: #{tpu_custom_call.1} parent=0
    #allocation2 [shape = 'u8[4096]{0}', space=vmem, size = 0x1000, scoped, tag = 'input window, operand 0, single buffered']
    #allocation3 [shape = 's32[1]{0}', space=sflag, size = 0x4, scoped, tag = 'scoped memory for tpu_custom_call.1']
    #allocation4 [shape = 's32[1]{0}', space=sflag, size = 0x4, scoped, tag = 'scoped memory for tpu_custom_call.1']
    #allocation5 [shape = 'u8[32768]{0}', space=vmem, size = 0x8000, scoped, tag = 'input window, operand 1, single buffered']
    #allocation6 [shape = 's32[1]{0}', space=sflag, size = 0x4, scoped, tag = 'scoped memory for tpu_custom_call.1']
    #allocation7 [shape = 'u8[8192]{0}', space=vmem, size = 0x2000, scoped, tag = 'output window, operand 0, single buffered']
    %8 = vsyncpa [#allocation3], 0
    %9 = vsyncpa [#allocation6], 0
    %10 = vsyncpa [#allocation4], 0
    // Predicated region
    $region2: #{tpu_custom_call.1} parent=1 // pred_check
      _
    $region3: #{tpu_custom_call.1} parent=1 // pred_check_branch
      %12 = sbr.rel (0) target = $region5
    $region4: #{tpu_custom_call.1} parent=1 // pred_region
      %14 = vsyncadd [#allocation3], 0
      %s15 = sshll.u32 %s0, 4
      %s16 = int_to_ptr.hbm [resolvable:$true] %s15
      %s17 = sshll.u32 [#allocation2], 4
      %s18 = int_to_ptr.vmem [resolvable:$true] %s17
      %23 = dma.hbm_to_vmem [thread:$0]  %s16, 128, %s18, [#allocation3], 64, 64, 4
    $region5: #{tpu_custom_call.1} parent=1 // pred_fallthru
      _
    // Predicated region
    $region6: #{tpu_custom_call.1} parent=1 // pred_check
      _
    $region7: #{tpu_custom_call.1} parent=1 // pred_check_branch
      %25 = sbr.rel (0) target = $region9
    $region8: #{tpu_custom_call.1} parent=1 // pred_region
      %27 = vsyncadd [#allocation6], 0
      %s28 = sshll.u32 %s1, 4
      %s29 = int_to_ptr.hbm [resolvable:$true] %s28
      %s30 = sshll.u32 [#allocation5], 4
      %s31 = int_to_ptr.vmem [resolvable:$true] %s30
      %36 = dma.hbm_to_vmem [thread:$0]  %s29, 1024, %s31, [#allocation6], 64, 64, 4
    $region9: #{tpu_custom_call.1} parent=1 // pred_fallthru
      _
    // Predicated region
    $region10: #{tpu_custom_call.1} parent=1 // pred_check
      _
    $region11: #{tpu_custom_call.1} parent=1 // pred_check_branch
      %38 = sbr.rel (0) target = $region13
    $region12: #{tpu_custom_call.1} parent=1 // pred_region
      _
    $region13: #{tpu_custom_call.1} parent=1 // pred_fallthru
      _
    // Predicated region
    $region14: #{tpu_custom_call.1} parent=1 // pred_check
      _
    $region15: #{tpu_custom_call.1} parent=1 // pred_check_branch
      %40 = sbr.rel (0) target = $region17
    $region16: #{tpu_custom_call.1} parent=1 // pred_region
      %42 = dma.done [#allocation3], 128
    $region17: #{tpu_custom_call.1} parent=1 // pred_fallthru
      _
    // Predicated region
    $region18: #{tpu_custom_call.1} parent=1 // pred_check
      _
    $region19: #{tpu_custom_call.1} parent=1 // pred_check_branch
      %44 = sbr.rel (0) target = $region21
    $region20: #{tpu_custom_call.1} parent=1 // pred_region
      %46 = dma.done [#allocation6], 1024
    $region21: #{tpu_custom_call.1} parent=1 // pred_fallthru
      _
    %v47 = vld [vmem:[#allocation2] sm:$0xf]
    %v48 = vld [vmem:[#allocation2 + $0x4] sm:$0xf]
    %v49 = vld [vmem:[#allocation5] sm:$0xf]
    %v50 = vld [vmem:[#allocation5 + $0x4] sm:$0xf]
    %v51 = vld [vmem:[#allocation5 + $0x8] sm:$0xf]
    %v52 = vld [vmem:[#allocation5 + $0xc] sm:$0xf]
    %v53 = vld [vmem:[#allocation5 + $0x10] sm:$0xf]
    %v54 = vld [vmem:[#allocation5 + $0x14] sm:$0xf]
    %v55 = vld [vmem:[#allocation5 + $0x18] sm:$0xf]
    %v56 = vld [vmem:[#allocation5 + $0x1c] sm:$0xf]
    %v57 = vld [vmem:[#allocation5 + $0x20] sm:$0xf]
    %v58 = vld [vmem:[#allocation5 + $0x24] sm:$0xf]
    %v59 = vld [vmem:[#allocation5 + $0x28] sm:$0xf]
    %v60 = vld [vmem:[#allocation5 + $0x2c] sm:$0xf]
    %v61 = vld [vmem:[#allocation5 + $0x30] sm:$0xf]
    %v62 = vld [vmem:[#allocation5 + $0x34] sm:$0xf]
    %v63 = vld [vmem:[#allocation5 + $0x38] sm:$0xf]
    %v64 = vld [vmem:[#allocation5 + $0x3c] sm:$0xf]
    %v65 = vld [vmem:[%s2] sm:$0x1]
    %v67 = vperm.slane %v65, 0
    %v71 = vunpack.c.l.b16 %v47
    %v72 = vunpack.c.l.b16 %v48
    %v73 = vpack.c.b16 %v72, %v71
    %v91 = vunpack.c.l.b16 %v49
    %v92 = vunpack.c.l.b16 %v50
    %v93 = vunpack.c.l.b16 %v51
    %v94 = vunpack.c.l.b16 %v52
    %v95 = vunpack.c.l.b16 %v53
    %v96 = vunpack.c.l.b16 %v54
    %v97 = vunpack.c.l.b16 %v55
    %v98 = vunpack.c.l.b16 %v56
    %v99 = vunpack.c.l.b16 %v57
    %v100 = vunpack.c.l.b16 %v58
    %v101 = vunpack.c.l.b16 %v59
    %v102 = vunpack.c.l.b16 %v60
    %v103 = vunpack.c.l.b16 %v61
    %v104 = vunpack.c.l.b16 %v62
    %v105 = vunpack.c.l.b16 %v63
    %v106 = vunpack.c.l.b16 %v64
    %v107 = vpack.c.b16 %v92, %v91
    %v108 = vpack.c.b16 %v94, %v93
    %v109 = vpack.c.b16 %v96, %v95
    %v110 = vpack.c.b16 %v98, %v97
    %v111 = vpack.c.b16 %v100, %v99
    %v112 = vpack.c.b16 %v102, %v101
    %v113 = vpack.c.b16 %v104, %v103
    %v114 = vpack.c.b16 %v106, %v105
    %123 = vmatpush.bf16.msra.mxu0 %v114
    %124 = vmatpush.bf16.msra.mxu0 %v113
    %125 = vmatpush.bf16.msra.mxu0 %v112
    %126 = vmatpush.bf16.msra.mxu0 %v111
    %127 = vmatpush.bf16.msra.mxu0 %v110
    %128 = vmatpush.bf16.msra.mxu0 %v109
    %129 = vmatpush.bf16.msra.mxu0 %v108
    %130 = vmatpush.bf16.msra.mxu0 %v107
    %131 = vmatmul.bf16.gmra.mxu0 %v73
    %v132 = vpop.f32.mrf.mxu0
    %v133 = vadd.f32 %v67, %v132
    %v134 = vpop.f32.mrf.mxu0
    %v135 = vadd.f32 %v67, %v134
    %136 = vdwg.mxu0
    %137 = vmax.xlane.f32.xlu0 %v133
    %v138 = vpop.xlane.xlu0 %137
    %139 = vmax.xlane.f32.xlu0 %v135
    %v140 = vpop.xlane.xlu0 %139
    %v141 = vsub.f32 %v133, %v138
    %v142 = vsub.f32 %v135, %v140
    %v143 = vmul.f32 %v141, 1.442695
    %v144 = vpow.pop %v143
    %v145 = vmul.f32 %v142, 1.442695
    %v146 = vpow.pop %v145
    %147 = vadd.xlane.f32.xlu0 %v144
    %v148 = vpop.xlane.xlu0 %147
    %149 = vadd.xlane.f32.xlu0 %v146
    %v150 = vpop.xlane.xlu0 %149
    %v151 = vrcp.pop %v148
    %v152 = vrcp.pop %v150
    %v153 = vmul.f32 %v144, %v151
    %v154 = vmul.f32 %v146, %v152
    %155 = vst [vmem:[#allocation7] sm:$0xff] %v153
    %156 = vst [vmem:[#allocation7 + $0x8] sm:$0xff] %v154
    // Predicated region
    $region22: #{tpu_custom_call.1} parent=1 // pred_check
      _
    $region23: #{tpu_custom_call.1} parent=1 // pred_check_branch
      %158 = sbr.rel (0) target = $region25
    $region24: #{tpu_custom_call.1} parent=1 // pred_region
      %160 = vsyncadd [#allocation4], 0
      %s161 = sshll.u32 [#allocation7], 4
      %s162 = int_to_ptr.vmem [resolvable:$true] %s161
      %s163 = sshll.u32 %s3, 4
      %s164 = int_to_ptr.hbm [resolvable:$true] %s163
      %169 = dma.vmem_to_hbm [thread:$0]  %s162, 256, %s164, [#allocation4], 128, 128, 8
    $region25: #{tpu_custom_call.1} parent=1 // pred_fallthru
      _
    // Predicated region
    $region26: #{tpu_custom_call.1} parent=1 // pred_check
      _
    $region27: #{tpu_custom_call.1} parent=1 // pred_check_branch
      %171 = sbr.rel (0) target = $region29
    $region28: #{tpu_custom_call.1} parent=1 // pred_region
      %173 = dma.done [#allocation4], 256
    $region29: #{tpu_custom_call.1} parent=1 // pred_fallthru
      _
    %174 = vsyncpa [#allocation3], 1
    %175 = vsyncpa [#allocation6], 1
    %176 = vsyncpa [#allocation4], 1

</llo_original>
